<compile_context>
chip_gen: v7x
topology: tpu7x:2x2x1
jax: 0.10.0
libtpu: 0.0.40
codegen_flags: <defaults>
</compile_context>

<pallas_src>
import functools
import math

import jax
import jax.numpy as jnp
from jax.experimental import pallas as pl
from jax.experimental.pallas import tpu as pltpu


# ---------------------------------------------------------------------------
# Pallas kernel: fused Linear(1024,16) + ReLU + Linear(16,2) + Softmax(dim=1)
# ---------------------------------------------------------------------------
def _order_classifier_kernel(x_ref, w1_ref, b1_ref, w2_ref, b2_ref, o_ref):
    # Layer 1: [tb, 1024] @ [1024, 16] -> [tb, 16]  (MXU, f32 accumulate; no transpose)
    h = jnp.dot(x_ref[...], w1_ref[...], preferred_element_type=jnp.float32)
    h = jnp.maximum(h + b1_ref[...], 0.0)                              # bias + ReLU (VPU)
    # Layer 2: [tb, 16] @ [16, 2] -> [tb, 2]
    logits = jnp.dot(h, w2_ref[...], preferred_element_type=jnp.float32) + b2_ref[...]
    # Numerically stable softmax over dim=1.
    m = jnp.max(logits, axis=-1, keepdims=True)
    e = jnp.exp(logits - m)
    denom = jnp.sum(e, axis=-1, keepdims=True)
    o_ref[...] = (e / denom).astype(o_ref.dtype)


def _batch_tile(B):
    # Largest batch tile <= 128 that divides B and satisfies the sublane rule
    # (a multiple of 8, or the full batch dimension).
    if B % 8 == 0:
        tb = 8
        while tb * 2 <= min(B, 128) and B % (tb * 2) == 0:
            tb *= 2
        return tb
    return B


# ---------------------------------------------------------------------------
# Wrapper
# ---------------------------------------------------------------------------
@jax.jit
def order_classifier_forward(emb, params):
    """params: dict with w1 [1024,16], b1 [1,16], w2 [16,2], b2 [1,2]
    (weights already transposed to [in, out])."""
    B = emb.shape[0]
    x = emb.reshape(B, -1)                      # Flatten
    in_f = x.shape[1]
    w1, b1, w2, b2 = params["w1"], params["b1"], params["w2"], params["b2"]
    hid = w1.shape[1]
    n_cls = w2.shape[1]

    tb = _batch_tile(B)
    grid = (B // tb,)

    return pl.pallas_call(
        _order_classifier_kernel,
        out_shape=jax.ShapeDtypeStruct((B, n_cls), x.dtype),
        grid=grid,
        in_specs=[
            pl.BlockSpec((tb, in_f), lambda i: (i, 0)),      # x tile, pipelined over batch
            pl.BlockSpec((in_f, hid), lambda i: (0, 0)),     # w1, VMEM-resident
            pl.BlockSpec((1, hid), lambda i: (0, 0)),        # b1
            pl.BlockSpec((hid, n_cls), lambda i: (0, 0)),    # w2
            pl.BlockSpec((1, n_cls), lambda i: (0, 0)),      # b2
        ],
        out_specs=pl.BlockSpec((tb, n_cls), lambda i: (i, 0)),
        compiler_params=pltpu.CompilerParams(
            dimension_semantics=("parallel",)),
    )(x, w1, b1, w2, b2)


# ---------------------------------------------------------------------------
# Deterministic parameter construction (mirrors init_relu_ / init_ in the module:
# orthogonal weights with the appropriate gain, zero biases). Stored pre-transposed
# as [in, out] so the kernel never transposes on-chip.
# ---------------------------------------------------------------------------
def make_order_classifier_params(key, in_features=1024, hidden=16, n_classes=2):
    k1, k2 = jax.random.split(key)
    relu_gain = math.sqrt(2.0)                         # nn.init.calculate_gain('relu')
    w1_pt = jax.nn.initializers.orthogonal(scale=relu_gain)(
        k1, (hidden, in_features), jnp.float32)        # PyTorch [out, in] convention
    w2_pt = jax.nn.initializers.orthogonal(scale=1.0)(
        k2, (n_classes, hidden), jnp.float32)
    return {
        "w1": jnp.asarray(w1_pt.T),                    # [in, out]
        "b1": jnp.zeros((1, hidden), jnp.float32),
        "w2": jnp.asarray(w2_pt.T),
        "b2": jnp.zeros((1, n_classes), jnp.float32),
    }


# ---------------------------------------------------------------------------
def _reference(emb, p):
    x = emb.reshape(emb.shape[0], -1)
    h = jax.nn.relu(x @ p["w1"] + p["b1"])
    logits = h @ p["w2"] + p["b2"]
    return jax.nn.softmax(logits, axis=1)


if __name__ == "__main__":
    key = jax.random.PRNGKey(0)
    k_params, k_x = jax.random.split(key)

    params = make_order_classifier_params(k_params)
    # Flatten(4*16*16) == 1024, matching nn.Linear(1024, 16).
    emb = jax.random.normal(k_x, (2, 4, 16, 16), dtype=jnp.float32)

    y = order_classifier_forward(emb, params)
    jax.block_until_ready(y)

    ref = _reference(emb, params)
    assert y.shape == (2, 2)
    assert jnp.allclose(y, ref, atol=1e-5, rtol=1e-5)
    assert jnp.allclose(jnp.sum(y, axis=1), 1.0, atol=1e-5)

    print("KERNEL_OK")
</pallas_src>

<mosaic_0001>
module attributes {stable_mosaic.version = 11 : i64} {
  func.func @_order_classifier_kernel(%arg0: i32, %arg1: memref<2x1024xf32, #tpu.memory_space<vmem>>, %arg2: memref<1024x16xf32, #tpu.memory_space<vmem>>, %arg3: memref<1x16xf32, #tpu.memory_space<vmem>>, %arg4: memref<16x2xf32, #tpu.memory_space<vmem>>, %arg5: memref<1x2xf32, #tpu.memory_space<vmem>>, %arg6: memref<2x2xf32, #tpu.memory_space<vmem>>) attributes {dimension_semantics = [#tpu.dimension_semantics<parallel>], iteration_bounds = array<i64: 1>, scalar_prefetch = 0 : i64, scratch_operands = 0 : i64, tpu.core_type = #tpu.core_type<tc>, window_params = [{transform_indices = @transform_0, window_bounds = array<i64: 2, 1024>}, {pipeline_mode = #tpu.pipeline_mode<synchronous>, transform_indices = @transform_1, window_bounds = array<i64: 1024, 16>}, {pipeline_mode = #tpu.pipeline_mode<synchronous>, transform_indices = @transform_2, window_bounds = array<i64: 1, 16>}, {pipeline_mode = #tpu.pipeline_mode<synchronous>, transform_indices = @transform_3, window_bounds = array<i64: 16, 2>}, {pipeline_mode = #tpu.pipeline_mode<synchronous>, transform_indices = @transform_4, window_bounds = array<i64: 1, 2>}, {transform_indices = @transform_5, window_bounds = array<i64: 2, 2>}]} {
    %c0 = arith.constant 0 : index
    %c0_0 = arith.constant 0 : index
    %0 = vector.load %arg1[%c0, %c0_0] : memref<2x1024xf32, #tpu.memory_space<vmem>>, vector<2x1024xf32>
    %c0_1 = arith.constant 0 : index
    %c0_2 = arith.constant 0 : index
    %1 = vector.load %arg2[%c0_1, %c0_2] : memref<1024x16xf32, #tpu.memory_space<vmem>>, vector<1024x16xf32>
    %cst = arith.constant dense<0.000000e+00> : vector<2x16xf32>
    %2 = tpu.matmul %0, %1, %cst {dimension_numbers = #tpu.dot_dimension_numbers<[1], [0], [0], [1], [0, 0, 1, 1], [], []>} : vector<2x1024xf32>, vector<1024x16xf32>, vector<2x16xf32> -> vector<2x16xf32>
    %c0_3 = arith.constant 0 : index
    %c0_4 = arith.constant 0 : index
    %3 = vector.load %arg3[%c0_3, %c0_4] : memref<1x16xf32, #tpu.memory_space<vmem>>, vector<1x16xf32>
    %4 = vector.broadcast %3 : vector<1x16xf32> to vector<2x16xf32>
    %5 = arith.addf %2, %4 : vector<2x16xf32>
    %cst_5 = arith.constant 0.000000e+00 : f32
    %6 = vector.broadcast %cst_5 : f32 to vector<2x16xf32>
    %7 = arith.maximumf %5, %6 : vector<2x16xf32>
    %c0_6 = arith.constant 0 : index
    %c0_7 = arith.constant 0 : index
    %8 = vector.load %arg4[%c0_6, %c0_7] : memref<16x2xf32, #tpu.memory_space<vmem>>, vector<16x2xf32>
    %cst_8 = arith.constant dense<0.000000e+00> : vector<2x2xf32>
    %9 = tpu.matmul %7, %8, %cst_8 {dimension_numbers = #tpu.dot_dimension_numbers<[1], [0], [0], [1], [0, 0, 1, 1], [], []>} : vector<2x16xf32>, vector<16x2xf32>, vector<2x2xf32> -> vector<2x2xf32>
    %c0_9 = arith.constant 0 : index
    %c0_10 = arith.constant 0 : index
    %10 = vector.load %arg5[%c0_9, %c0_10] : memref<1x2xf32, #tpu.memory_space<vmem>>, vector<1x2xf32>
    %11 = vector.broadcast %10 : vector<1x2xf32> to vector<2x2xf32>
    %12 = arith.addf %9, %11 : vector<2x2xf32>
    %cst_11 = arith.constant dense<0xFF800000> : vector<2xf32>
    %13 = vector.multi_reduction <maximumf>, %12, %cst_11 [1] : vector<2x2xf32> to vector<2xf32>
    %14 = vector.shape_cast %13 : vector<2xf32> to vector<2x1xf32>
    %15 = vector.broadcast %14 : vector<2x1xf32> to vector<2x2xf32>
    %16 = arith.subf %12, %15 : vector<2x2xf32>
    %17 = math.exp %16 : vector<2x2xf32>
    %cst_12 = arith.constant dense<0.000000e+00> : vector<2xf32>
    %18 = vector.multi_reduction <add>, %17, %cst_12 [1] : vector<2x2xf32> to vector<2xf32>
    %19 = vector.shape_cast %18 : vector<2xf32> to vector<2x1xf32>
    %20 = vector.broadcast %19 : vector<2x1xf32> to vector<2x2xf32>
    %21 = arith.divf %17, %20 : vector<2x2xf32>
    %c0_13 = arith.constant 0 : index
    %c0_14 = arith.constant 0 : index
    %22 = vector.load %arg6[%c0_13, %c0_14] : memref<2x2xf32, #tpu.memory_space<vmem>>, vector<2x2xf32>
    tpu.vector_store %arg6[%c0_13, %c0_14], %21 {strides = array<i32>} : memref<2x2xf32, #tpu.memory_space<vmem>>, vector<2x2xf32>,
    return
  }
  func.func @transform_0(%arg0: i32) -> (i32, i32) {
    %c0_i32 = arith.constant 0 : i32
    %c0_i32_0 = arith.constant 0 : i32
    return %arg0, %c0_i32 : i32, i32
  }
  func.func @transform_1(%arg0: i32) -> (i32, i32) {
    %c0_i32 = arith.constant 0 : i32
    %c0_i32_0 = arith.constant 0 : i32
    %c0_i32_1 = arith.constant 0 : i32
    return %c0_i32, %c0_i32_0 : i32, i32
  }
  func.func @transform_2(%arg0: i32) -> (i32, i32) {
    %c0_i32 = arith.constant 0 : i32
    %c0_i32_0 = arith.constant 0 : i32
    %c0_i32_1 = arith.constant 0 : i32
    return %c0_i32, %c0_i32_0 : i32, i32
  }
  func.func @transform_3(%arg0: i32) -> (i32, i32) {
    %c0_i32 = arith.constant 0 : i32
    %c0_i32_0 = arith.constant 0 : i32
    %c0_i32_1 = arith.constant 0 : i32
    return %c0_i32, %c0_i32_0 : i32, i32
  }
  func.func @transform_4(%arg0: i32) -> (i32, i32) {
    %c0_i32 = arith.constant 0 : i32
    %c0_i32_0 = arith.constant 0 : i32
    %c0_i32_1 = arith.constant 0 : i32
    return %c0_i32, %c0_i32_0 : i32, i32
  }
  func.func @transform_5(%arg0: i32) -> (i32, i32) {
    %c0_i32 = arith.constant 0 : i32
    %c0_i32_0 = arith.constant 0 : i32
    return %arg0, %c0_i32 : i32, i32
  }
}

</mosaic_0001>

<llo_original>
// kernel: order_classifier_forward.1
$region0: #{order_classifier_forward.1}
  #allocation0 [shape = 'u32[]', space=smem, size = 0x4, offset = 0x4, fixed_abs, tag = 'smem constant byte address 0x4 - core index']
  #allocation1 [shape = 'u32[144,128]{1,0:T(1,128)}', space=vmem, size = 0x12000, scoped, tag = 'internal scratch']
  %s0 = inlined_call_operand.vmem [shape: f32[2,1024], index: 0, kind: input, shape index: {}]
  %s1 = inlined_call_operand.vmem [shape: f32[1024,16], index: 1, kind: input, shape index: {}]
  %s2 = inlined_call_operand.vmem [shape: f32[1,16], index: 2, kind: input, shape index: {}]
  %s3 = inlined_call_operand.vmem [shape: f32[16,2], index: 3, kind: input, shape index: {}]
  %s4 = inlined_call_operand.vmem [shape: f32[1,2], index: 4, kind: input, shape index: {}]
  %s5 = inlined_call_operand.hbm [shape: f32[2,2], index: 5, kind: output, shape index: {}]
  %s6 = sld [smem:[#allocation0]]
  $region30: #{order_classifier_forward.1} parent=0
    _
  %s8 = ssub.s32 1, %s6
  %s9 = scalar_select 0, %s8, %s6
  $region1: #{order_classifier_forward.1} parent=0
    #allocation2 [shape = 'u8[1024]{0}', space=vmem, size = 0x400, scoped, tag = 'output window, operand 0, single buffered']
    #allocation3 [shape = 's32[1]{0}', space=sflag, size = 0x4, scoped, tag = 'scoped memory for order_classifier_forward.1']
    %10 = vsyncpa [#allocation3], 0
    // Predicated region
    $region2: #{order_classifier_forward.1} parent=1 // pred_check
      _
    $region3: #{order_classifier_forward.1} parent=1 // pred_check_branch
      %12 = sbr.rel (0) target = $region5
    $region4: #{order_classifier_forward.1} parent=1 // pred_region
      _
    $region5: #{order_classifier_forward.1} parent=1 // pred_fallthru
      _
    // Predicated region
    $region6: #{order_classifier_forward.1} parent=1 // pred_check
      _
    $region7: #{order_classifier_forward.1} parent=1 // pred_check_branch
      %14 = sbr.rel (0) target = $region9
    $region8: #{order_classifier_forward.1} parent=1 // pred_region
      _
    $region9: #{order_classifier_forward.1} parent=1 // pred_fallthru
      _
    // Predicated region
    $region10: #{order_classifier_forward.1} parent=1 // pred_check
      _
    $region11: #{order_classifier_forward.1} parent=1 // pred_check_branch
      %16 = sbr.rel (0) target = $region13
    $region12: #{order_classifier_forward.1} parent=1 // pred_region
      _
    $region13: #{order_classifier_forward.1} parent=1 // pred_fallthru
      _
    // Predicated region
    $region14: #{order_classifier_forward.1} parent=1 // pred_check
      _
    $region15: #{order_classifier_forward.1} parent=1 // pred_check_branch
      %18 = sbr.rel (0) target = $region17
    $region16: #{order_classifier_forward.1} parent=1 // pred_region
      _
    $region17: #{order_classifier_forward.1} parent=1 // pred_fallthru
      _
    // Predicated region
    $region18: #{order_classifier_forward.1} parent=1 // pred_check
      _
    $region19: #{order_classifier_forward.1} parent=1 // pred_check_branch
      %20 = sbr.rel (0) target = $region21
    $region20: #{order_classifier_forward.1} parent=1 // pred_region
      _
    $region21: #{order_classifier_forward.1} parent=1 // pred_fallthru
      _
    %v21 = vld [vmem:[%s0] sm:$0xff]
    %v22 = vld [vmem:[%s0 + $0x8] sm:$0xff]
    %v23 = vld [vmem:[%s1] sm:$0xff]
    %v24 = vld [vmem:[%s1 + $0x8] sm:$0xff]
    %v25 = vld [vmem:[%s1 + $0x10] sm:$0xff]
    %v26 = vld [vmem:[%s1 + $0x18] sm:$0xff]
    %v27 = vld [vmem:[%s1 + $0x20] sm:$0xff]
    %v28 = vld [vmem:[%s1 + $0x28] sm:$0xff]
    %v29 = vld [vmem:[%s1 + $0x30] sm:$0xff]
    %v30 = vld [vmem:[%s1 + $0x38] sm:$0xff]
    %v31 = vld [vmem:[%s1 + $0x40] sm:$0xff]
    %v32 = vld [vmem:[%s1 + $0x48] sm:$0xff]
    %v33 = vld [vmem:[%s1 + $0x50] sm:$0xff]
    %v34 = vld [vmem:[%s1 + $0x58] sm:$0xff]
    %v35 = vld [vmem:[%s1 + $0x60] sm:$0xff]
    %v36 = vld [vmem:[%s1 + $0x68] sm:$0xff]
    %v37 = vld [vmem:[%s1 + $0x70] sm:$0xff]
    %v38 = vld [vmem:[%s1 + $0x78] sm:$0xff]
    %v39 = vld [vmem:[%s1 + $0x80] sm:$0xff]
    %v40 = vld [vmem:[%s1 + $0x88] sm:$0xff]
    %v41 = vld [vmem:[%s1 + $0x90] sm:$0xff]
    %v42 = vld [vmem:[%s1 + $0x98] sm:$0xff]
    %v43 = vld [vmem:[%s1 + $0xa0] sm:$0xff]
    %v44 = vld [vmem:[%s1 + $0xa8] sm:$0xff]
    %v45 = vld [vmem:[%s1 + $0xb0] sm:$0xff]
    %v46 = vld [vmem:[%s1 + $0xb8] sm:$0xff]
    %v47 = vld [vmem:[%s1 + $0xc0] sm:$0xff]
    %v48 = vld [vmem:[%s1 + $0xc8] sm:$0xff]
    %v49 = vld [vmem:[%s1 + $0xd0] sm:$0xff]
    %v50 = vld [vmem:[%s1 + $0xd8] sm:$0xff]
    %v51 = vld [vmem:[%s1 + $0xe0] sm:$0xff]
    %v52 = vld [vmem:[%s1 + $0xe8] sm:$0xff]
    %v53 = vld [vmem:[%s1 + $0xf0] sm:$0xff]
    %v54 = vld [vmem:[%s1 + $0xf8] sm:$0xff]
    %v55 = vld [vmem:[%s1 + $0x100] sm:$0xff]
    %v56 = vld [vmem:[%s1 + $0x108] sm:$0xff]
    %v57 = vld [vmem:[%s1 + $0x110] sm:$0xff]
    %v58 = vld [vmem:[%s1 + $0x118] sm:$0xff]
    %v59 = vld [vmem:[%s1 + $0x120] sm:$0xff]
    %v60 = vld [vmem:[%s1 + $0x128] sm:$0xff]
    %v61 = vld [vmem:[%s1 + $0x130] sm:$0xff]
    %v62 = vld [vmem:[%s1 + $0x138] sm:$0xff]
    %v63 = vld [vmem:[%s1 + $0x140] sm:$0xff]
    %v64 = vld [vmem:[%s1 + $0x148] sm:$0xff]
    %v65 = vld [vmem:[%s1 + $0x150] sm:$0xff]
    %v66 = vld [vmem:[%s1 + $0x158] sm:$0xff]
    %v67 = vld [vmem:[%s1 + $0x160] sm:$0xff]
    %v68 = vld [vmem:[%s1 + $0x168] sm:$0xff]
    %v69 = vld [vmem:[%s1 + $0x170] sm:$0xff]
    %v70 = vld [vmem:[%s1 + $0x178] sm:$0xff]
    %v71 = vld [vmem:[%s1 + $0x180] sm:$0xff]
    %v72 = vld [vmem:[%s1 + $0x188] sm:$0xff]
    %v73 = vld [vmem:[%s1 + $0x190] sm:$0xff]
    %v74 = vld [vmem:[%s1 + $0x198] sm:$0xff]
    %v75 = vld [vmem:[%s1 + $0x1a0] sm:$0xff]
    %v76 = vld [vmem:[%s1 + $0x1a8] sm:$0xff]
    %v77 = vld [vmem:[%s1 + $0x1b0] sm:$0xff]
    %v78 = vld [vmem:[%s1 + $0x1b8] sm:$0xff]
    %v79 = vld [vmem:[%s1 + $0x1c0] sm:$0xff]
    %v80 = vld [vmem:[%s1 + $0x1c8] sm:$0xff]
    %v81 = vld [vmem:[%s1 + $0x1d0] sm:$0xff]
    %v82 = vld [vmem:[%s1 + $0x1d8] sm:$0xff]
    %v83 = vld [vmem:[%s1 + $0x1e0] sm:$0xff]
    %v84 = vld [vmem:[%s1 + $0x1e8] sm:$0xff]
    %v85 = vld [vmem:[%s1 + $0x1f0] sm:$0xff]
    %v86 = vld [vmem:[%s1 + $0x1f8] sm:$0xff]
    %v87 = vld [vmem:[%s1 + $0x200] sm:$0xff]
    %v88 = vld [vmem:[%s1 + $0x208] sm:$0xff]
    %v89 = vld [vmem:[%s1 + $0x210] sm:$0xff]
    %v90 = vld [vmem:[%s1 + $0x218] sm:$0xff]
    %v91 = vld [vmem:[%s1 + $0x220] sm:$0xff]
    %v92 = vld [vmem:[%s1 + $0x228] sm:$0xff]
    %v93 = vld [vmem:[%s1 + $0x230] sm:$0xff]
    %v94 = vld [vmem:[%s1 + $0x238] sm:$0xff]
    %v95 = vld [vmem:[%s1 + $0x240] sm:$0xff]
    %v96 = vld [vmem:[%s1 + $0x248] sm:$0xff]
    %v97 = vld [vmem:[%s1 + $0x250] sm:$0xff]
    %v98 = vld [vmem:[%s1 + $0x258] sm:$0xff]
    %v99 = vld [vmem:[%s1 + $0x260] sm:$0xff]
    %v100 = vld [vmem:[%s1 + $0x268] sm:$0xff]
    %v101 = vld [vmem:[%s1 + $0x270] sm:$0xff]
    %v102 = vld [vmem:[%s1 + $0x278] sm:$0xff]
    %v103 = vld [vmem:[%s1 + $0x280] sm:$0xff]
    %v104 = vld [vmem:[%s1 + $0x288] sm:$0xff]
    %v105 = vld [vmem:[%s1 + $0x290] sm:$0xff]
    %v106 = vld [vmem:[%s1 + $0x298] sm:$0xff]
    %v107 = vld [vmem:[%s1 + $0x2a0] sm:$0xff]
    %v108 = vld [vmem:[%s1 + $0x2a8] sm:$0xff]
    %v109 = vld [vmem:[%s1 + $0x2b0] sm:$0xff]
    %v110 = vld [vmem:[%s1 + $0x2b8] sm:$0xff]
    %v111 = vld [vmem:[%s1 + $0x2c0] sm:$0xff]
    %v112 = vld [vmem:[%s1 + $0x2c8] sm:$0xff]
    %v113 = vld [vmem:[%s1 + $0x2d0] sm:$0xff]
    %v114 = vld [vmem:[%s1 + $0x2d8] sm:$0xff]
    %v115 = vld [vmem:[%s1 + $0x2e0] sm:$0xff]
    %v116 = vld [vmem:[%s1 + $0x2e8] sm:$0xff]
    %v117 = vld [vmem:[%s1 + $0x2f0] sm:$0xff]
    %v118 = vld [vmem:[%s1 + $0x2f8] sm:$0xff]
    %v119 = vld [vmem:[%s1 + $0x300] sm:$0xff]
    %v120 = vld [vmem:[%s1 + $0x308] sm:$0xff]
    %v121 = vld [vmem:[%s1 + $0x310] sm:$0xff]
    %v122 = vld [vmem:[%s1 + $0x318] sm:$0xff]
    %v123 = vld [vmem:[%s1 + $0x320] sm:$0xff]
    %v124 = vld [vmem:[%s1 + $0x328] sm:$0xff]
    %v125 = vld [vmem:[%s1 + $0x330] sm:$0xff]
    %v126 = vld [vmem:[%s1 + $0x338] sm:$0xff]
    %v127 = vld [vmem:[%s1 + $0x340] sm:$0xff]
    %v128 = vld [vmem:[%s1 + $0x348] sm:$0xff]
    %v129 = vld [vmem:[%s1 + $0x350] sm:$0xff]
    %v130 = vld [vmem:[%s1 + $0x358] sm:$0xff]
    %v131 = vld [vmem:[%s1 + $0x360] sm:$0xff]
    %v132 = vld [vmem:[%s1 + $0x368] sm:$0xff]
    %v133 = vld [vmem:[%s1 + $0x370] sm:$0xff]
    %v134 = vld [vmem:[%s1 + $0x378] sm:$0xff]
    %v135 = vld [vmem:[%s1 + $0x380] sm:$0xff]
    %v136 = vld [vmem:[%s1 + $0x388] sm:$0xff]
    %v137 = vld [vmem:[%s1 + $0x390] sm:$0xff]
    %v138 = vld [vmem:[%s1 + $0x398] sm:$0xff]
    %v139 = vld [vmem:[%s1 + $0x3a0] sm:$0xff]
    %v140 = vld [vmem:[%s1 + $0x3a8] sm:$0xff]
    %v141 = vld [vmem:[%s1 + $0x3b0] sm:$0xff]
    %v142 = vld [vmem:[%s1 + $0x3b8] sm:$0xff]
    %v143 = vld [vmem:[%s1 + $0x3c0] sm:$0xff]
    %v144 = vld [vmem:[%s1 + $0x3c8] sm:$0xff]
    %v145 = vld [vmem:[%s1 + $0x3d0] sm:$0xff]
    %v146 = vld [vmem:[%s1 + $0x3d8] sm:$0xff]
    %v147 = vld [vmem:[%s1 + $0x3e0] sm:$0xff]
    %v148 = vld [vmem:[%s1 + $0x3e8] sm:$0xff]
    %v149 = vld [vmem:[%s1 + $0x3f0] sm:$0xff]
    %v150 = vld [vmem:[%s1 + $0x3f8] sm:$0xff]
    %v151 = vld [vmem:[%s2] sm:$0x1]
    %v153 = vlaneseq
    %v154 = vshrl.u32 %v153, 7
    %v155 = vsub.s32 0, %v154
    %v156 = vrot.slane %v151, %v155
    %v160 = vcombine.high %v21, %v21
    %v162 = vunpack.c.l.s4 1983009808
    %v163 = vunpack.c.0.s8 %v162
    %v164 = vlaneseq
    %v165 = vshrl.u32 %v164, 7
    %v166 = vsub.s32 %v163, %v165
    %v167 = vrot.slane %v21, %v166
    %v169 = vunpack.c.l.s4 1983009808
    %v170 = vunpack.c.0.s8 %v169
    %v171 = vlaneseq
    %v172 = vshrl.u32 %v171, 7
    %v173 = vsub.s32 %v170, %v172
    %v174 = vrot.slane %v160, %v173
    %v175 = vcombine.high %v167, %v167
    %v176 = vcombine.high %v174, %v174
    %v177 = vcombine.high %v22, %v22
    %v179 = vunpack.c.l.s4 1983009808
    %v180 = vunpack.c.0.s8 %v179
    %v181 = vlaneseq
    %v182 = vshrl.u32 %v181, 7
    %v183 = vsub.s32 %v180, %v182
    %v184 = vrot.slane %v22, %v183
    %v186 = vunpack.c.l.s4 1983009808
    %v187 = vunpack.c.0.s8 %v186
    %v188 = vlaneseq
    %v189 = vshrl.u32 %v188, 7
    %v190 = vsub.s32 %v187, %v189
    %v191 = vrot.slane %v177, %v190
    %v192 = vcombine.high %v184, %v184
    %v193 = vcombine.high %v191, %v191
    %202 = vmatprep.subr.mxu0 0.0
    %203 = vmatpush1.msra.mxu0 %v23
    %204 = vmatprep.subr.mxu0 0.0
    %205 = vmatpush1.msra.mxu0 %v24
    %206 = vmatprep.subr.mxu0 0.0
    %207 = vmatpush1.msra.mxu0 %v25
    %208 = vmatprep.subr.mxu0 0.0
    %209 = vmatpush1.msra.mxu0 %v26
    %210 = vmatprep.subr.mxu0 0.0
    %211 = vmatpush1.msra.mxu0 %v27
    %212 = vmatprep.subr.mxu0 0.0
    %213 = vmatpush1.msra.mxu0 %v28
    %214 = vmatprep.subr.mxu0 0.0
    %215 = vmatpush1.msra.mxu0 %v29
    %216 = vmatprep.subr.mxu0 0.0
    %217 = vmatpush1.msra.mxu0 %v30
    %218 = vmatprep.subr.mxu0 0.0
    %219 = vmatpush1.msra.mxu0 %v31
    %220 = vmatprep.subr.mxu0 0.0
    %221 = vmatpush1.msra.mxu0 %v32
    %222 = vmatprep.subr.mxu0 0.0
    %223 = vmatpush1.msra.mxu0 %v33
    %224 = vmatprep.subr.mxu0 0.0
    %225 = vmatpush1.msra.mxu0 %v34
    %226 = vmatprep.subr.mxu0 0.0
    %227 = vmatpush1.msra.mxu0 %v35
    %228 = vmatprep.subr.mxu0 0.0
    %229 = vmatpush1.msra.mxu0 %v36
    %230 = vmatprep.subr.mxu0 0.0
    %231 = vmatpush1.msra.mxu0 %v37
    %232 = vmatprep.subr.mxu0 0.0
    %233 = vmatpush1.msra.mxu0 %v38
    %234 = vmatprep.subr.mxu0 0.0
    %235 = vmatpush1.msra.mxu0 %v39
    %236 = vmatprep.subr.mxu0 0.0
    %237 = vmatpush1.msra.mxu0 %v40
    %238 = vmatprep.subr.mxu0 0.0
    %239 = vmatpush1.msra.mxu0 %v41
    %240 = vmatprep.subr.mxu0 0.0
    %241 = vmatpush1.msra.mxu0 %v42
    %242 = vmatprep.subr.mxu0 0.0
    %243 = vmatpush1.msra.mxu0 %v43
    %244 = vmatprep.subr.mxu0 0.0
    %245 = vmatpush1.msra.mxu0 %v44
    %246 = vmatprep.subr.mxu0 0.0
    %247 = vmatpush1.msra.mxu0 %v45
    %248 = vmatprep.subr.mxu0 0.0
    %249 = vmatpush1.msra.mxu0 %v46
    %250 = vmatprep.subr.mxu0 0.0
    %251 = vmatpush1.msra.mxu0 %v47
    %252 = vmatprep.subr.mxu0 0.0
    %253 = vmatpush1.msra.mxu0 %v48
    %254 = vmatprep.subr.mxu0 0.0
    %255 = vmatpush1.msra.mxu0 %v49
    %256 = vmatprep.subr.mxu0 0.0
    %257 = vmatpush1.msra.mxu0 %v50
    %258 = vmatprep.subr.mxu0 0.0
    %259 = vmatpush1.msra.mxu0 %v51
    %260 = vmatprep.subr.mxu0 0.0
    %261 = vmatpush1.msra.mxu0 %v52
    %262 = vmatprep.subr.mxu0 0.0
    %263 = vmatpush1.msra.mxu0 %v53
    %264 = vmatprep.subr.mxu0 0.0
    %265 = vmatpush1.msra.mxu0 %v54
    %266 = vmatprep.mubr.f32.mxu0 %v175
    %267 = vmatmul.mubr.f32.gmra.mrb[0].mxu0 %v167
    %v268 = vpop.f32.mrb[0].mxu0
    %v269 = vadd.f32 %v156, %v268
    %v270 = vpop.f32.mrb[0].mxu0
    %271 = vdwg.mxu0
    %272 = vmatprep.subr.mxu0 0.0
    %273 = vmatpush1.msra.mxu0 %v55
    %274 = vmatprep.subr.mxu0 0.0
    %275 = vmatpush1.msra.mxu0 %v56
    %276 = vmatprep.subr.mxu0 0.0
    %277 = vmatpush1.msra.mxu0 %v57
    %278 = vmatprep.subr.mxu0 0.0
    %279 = vmatpush1.msra.mxu0 %v58
    %280 = vmatprep.subr.mxu0 0.0
    %281 = vmatpush1.msra.mxu0 %v59
    %282 = vmatprep.subr.mxu0 0.0
    %283 = vmatpush1.msra.mxu0 %v60
    %284 = vmatprep.subr.mxu0 0.0
    %285 = vmatpush1.msra.mxu0 %v61
    %286 = vmatprep.subr.mxu0 0.0
    %287 = vmatpush1.msra.mxu0 %v62
    %288 = vmatprep.subr.mxu0 0.0
    %289 = vmatpush1.msra.mxu0 %v63
    %290 = vmatprep.subr.mxu0 0.0
    %291 = vmatpush1.msra.mxu0 %v64
    %292 = vmatprep.subr.mxu0 0.0
    %293 = vmatpush1.msra.mxu0 %v65
    %294 = vmatprep.subr.mxu0 0.0
    %295 = vmatpush1.msra.mxu0 %v66
    %296 = vmatprep.subr.mxu0 0.0
    %297 = vmatpush1.msra.mxu0 %v67
    %298 = vmatprep.subr.mxu0 0.0
    %299 = vmatpush1.msra.mxu0 %v68
    %300 = vmatprep.subr.mxu0 0.0
    %301 = vmatpush1.msra.mxu0 %v69
    %302 = vmatprep.subr.mxu0 0.0
    %303 = vmatpush1.msra.mxu0 %v70
    %304 = vmatprep.subr.mxu0 0.0
    %305 = vmatpush1.msra.mxu0 %v71
    %306 = vmatprep.subr.mxu0 0.0
    %307 = vmatpush1.msra.mxu0 %v72
    %308 = vmatprep.subr.mxu0 0.0
    %309 = vmatpush1.msra.mxu0 %v73
    %310 = vmatprep.subr.mxu0 0.0
    %311 = vmatpush1.msra.mxu0 %v74
    %312 = vmatprep.subr.mxu0 0.0
    %313 = vmatpush1.msra.mxu0 %v75
    %314 = vmatprep.subr.mxu0 0.0
    %315 = vmatpush1.msra.mxu0 %v76
    %316 = vmatprep.subr.mxu0 0.0
    %317 = vmatpush1.msra.mxu0 %v77
    %318 = vmatprep.subr.mxu0 0.0
    %319 = vmatpush1.msra.mxu0 %v78
    %320 = vmatprep.subr.mxu0 0.0
    %321 = vmatpush1.msra.mxu0 %v79
    %322 = vmatprep.subr.mxu0 0.0
    %323 = vmatpush1.msra.mxu0 %v80
    %324 = vmatprep.subr.mxu0 0.0
    %325 = vmatpush1.msra.mxu0 %v81
    %326 = vmatprep.subr.mxu0 0.0
    %327 = vmatpush1.msra.mxu0 %v82
    %328 = vmatprep.subr.mxu0 0.0
    %329 = vmatpush1.msra.mxu0 %v83
    %330 = vmatprep.subr.mxu0 0.0
    %331 = vmatpush1.msra.mxu0 %v84
    %332 = vmatprep.subr.mxu0 0.0
    %333 = vmatpush1.msra.mxu0 %v85
    %334 = vmatprep.subr.mxu0 0.0
    %335 = vmatpush1.msra.mxu0 %v86
    %336 = vmatprep.mubr.f32.mxu0 %v176
    %337 = vmatmul.mubr.f32.gmra.mrb[0].mxu0 %v174
    %v338 = vpop.f32.mrb[0].mxu0
    %v339 = vadd.f32 %v269, %v338
    %v340 = vpop.f32.mrb[0].mxu0
    %341 = vdwg.mxu0
    %342 = vmatprep.subr.mxu0 0.0
    %343 = vmatpush1.msra.mxu0 %v87
    %344 = vmatprep.subr.mxu0 0.0
    %345 = vmatpush1.msra.mxu0 %v88
    %346 = vmatprep.subr.mxu0 0.0
    %347 = vmatpush1.msra.mxu0 %v89
    %348 = vmatprep.subr.mxu0 0.0
    %349 = vmatpush1.msra.mxu0 %v90
    %350 = vmatprep.subr.mxu0 0.0
    %351 = vmatpush1.msra.mxu0 %v91
    %352 = vmatprep.subr.mxu0 0.0
    %353 = vmatpush1.msra.mxu0 %v92
    %354 = vmatprep.subr.mxu0 0.0
    %355 = vmatpush1.msra.mxu0 %v93
    %356 = vmatprep.subr.mxu0 0.0
    %357 = vmatpush1.msra.mxu0 %v94
    %358 = vmatprep.subr.mxu0 0.0
    %359 = vmatpush1.msra.mxu0 %v95
    %360 = vmatprep.subr.mxu0 0.0
    %361 = vmatpush1.msra.mxu0 %v96
    %362 = vmatprep.subr.mxu0 0.0
    %363 = vmatpush1.msra.mxu0 %v97
    %364 = vmatprep.subr.mxu0 0.0
    %365 = vmatpush1.msra.mxu0 %v98
    %366 = vmatprep.subr.mxu0 0.0
    %367 = vmatpush1.msra.mxu0 %v99
    %368 = vmatprep.subr.mxu0 0.0
    %369 = vmatpush1.msra.mxu0 %v100
    %370 = vmatprep.subr.mxu0 0.0
    %371 = vmatpush1.msra.mxu0 %v101
    %372 = vmatprep.subr.mxu0 0.0
    %373 = vmatpush1.msra.mxu0 %v102
    %374 = vmatprep.subr.mxu0 0.0
    %375 = vmatpush1.msra.mxu0 %v103
    %376 = vmatprep.subr.mxu0 0.0
    %377 = vmatpush1.msra.mxu0 %v104
    %378 = vmatprep.subr.mxu0 0.0
    %379 = vmatpush1.msra.mxu0 %v105
    %380 = vmatprep.subr.mxu0 0.0
    %381 = vmatpush1.msra.mxu0 %v106
    %382 = vmatprep.subr.mxu0 0.0
    %383 = vmatpush1.msra.mxu0 %v107
    %384 = vmatprep.subr.mxu0 0.0
    %385 = vmatpush1.msra.mxu0 %v108
    %386 = vmatprep.subr.mxu0 0.0
    %387 = vmatpush1.msra.mxu0 %v109
    %388 = vmatprep.subr.mxu0 0.0
    %389 = vmatpush1.msra.mxu0 %v110
    %390 = vmatprep.subr.mxu0 0.0
    %391 = vmatpush1.msra.mxu0 %v111
    %392 = vmatprep.subr.mxu0 0.0
    %393 = vmatpush1.msra.mxu0 %v112
    %394 = vmatprep.subr.mxu0 0.0
    %395 = vmatpush1.msra.mxu0 %v113
    %396 = vmatprep.subr.mxu0 0.0
    %397 = vmatpush1.msra.mxu0 %v114
    %398 = vmatprep.subr.mxu0 0.0
    %399 = vmatpush1.msra.mxu0 %v115
    %400 = vmatprep.subr.mxu0 0.0
    %401 = vmatpush1.msra.mxu0 %v116
    %402 = vmatprep.subr.mxu0 0.0
    %403 = vmatpush1.msra.mxu0 %v117
    %404 = vmatprep.subr.mxu0 0.0
    %405 = vmatpush1.msra.mxu0 %v118
    %406 = vmatprep.mubr.f32.mxu0 %v192
    %407 = vmatmul.mubr.f32.gmra.mrb[0].mxu0 %v184
    %v408 = vpop.f32.mrb[0].mxu0
    %v409 = vadd.f32 %v339, %v408
    %v410 = vpop.f32.mrb[0].mxu0
    %411 = vdwg.mxu0
    %412 = vmatprep.subr.mxu0 0.0
    %413 = vmatpush1.msra.mxu0 %v119
    %414 = vmatprep.subr.mxu0 0.0
    %415 = vmatpush1.msra.mxu0 %v120
    %416 = vmatprep.subr.mxu0 0.0
    %417 = vmatpush1.msra.mxu0 %v121
    %418 = vmatprep.subr.mxu0 0.0
    %419 = vmatpush1.msra.mxu0 %v122
    %420 = vmatprep.subr.mxu0 0.0
    %421 = vmatpush1.msra.mxu0 %v123
    %422 = vmatprep.subr.mxu0 0.0
    %423 = vmatpush1.msra.mxu0 %v124
    %424 = vmatprep.subr.mxu0 0.0
    %425 = vmatpush1.msra.mxu0 %v125
    %426 = vmatprep.subr.mxu0 0.0
    %427 = vmatpush1.msra.mxu0 %v126
    %428 = vmatprep.subr.mxu0 0.0
    %429 = vmatpush1.msra.mxu0 %v127
    %430 = vmatprep.subr.mxu0 0.0
    %431 = vmatpush1.msra.mxu0 %v128
    %432 = vmatprep.subr.mxu0 0.0
    %433 = vmatpush1.msra.mxu0 %v129
    %434 = vmatprep.subr.mxu0 0.0
    %435 = vmatpush1.msra.mxu0 %v130
    %436 = vmatprep.subr.mxu0 0.0
    %437 = vmatpush1.msra.mxu0 %v131
    %438 = vmatprep.subr.mxu0 0.0
    %439 = vmatpush1.msra.mxu0 %v132
    %440 = vmatprep.subr.mxu0 0.0
    %441 = vmatpush1.msra.mxu0 %v133
    %442 = vmatprep.subr.mxu0 0.0
    %443 = vmatpush1.msra.mxu0 %v134
    %444 = vmatprep.subr.mxu0 0.0
    %445 = vmatpush1.msra.mxu0 %v135
    %446 = vmatprep.subr.mxu0 0.0
    %447 = vmatpush1.msra.mxu0 %v136
    %448 = vmatprep.subr.mxu0 0.0
    %449 = vmatpush1.msra.mxu0 %v137
    %450 = vmatprep.subr.mxu0 0.0
    %451 = vmatpush1.msra.mxu0 %v138
    %452 = vmatprep.subr.mxu0 0.0
    %453 = vmatpush1.msra.mxu0 %v139
    %454 = vmatprep.subr.mxu0 0.0
    %455 = vmatpush1.msra.mxu0 %v140
    %456 = vmatprep.subr.mxu0 0.0
    %457 = vmatpush1.msra.mxu0 %v141
    %458 = vmatprep.subr.mxu0 0.0
    %459 = vmatpush1.msra.mxu0 %v142
    %460 = vmatprep.subr.mxu0 0.0
    %461 = vmatpush1.msra.mxu0 %v143
    %462 = vmatprep.subr.mxu0 0.0
    %463 = vmatpush1.msra.mxu0 %v144
    %464 = vmatprep.subr.mxu0 0.0
    %465 = vmatpush1.msra.mxu0 %v145
    %466 = vmatprep.subr.mxu0 0.0
    %467 = vmatpush1.msra.mxu0 %v146
    %468 = vmatprep.subr.mxu0 0.0
    %469 = vmatpush1.msra.mxu0 %v147
    %470 = vmatprep.subr.mxu0 0.0
    %471 = vmatpush1.msra.mxu0 %v148
    %472 = vmatprep.subr.mxu0 0.0
    %473 = vmatpush1.msra.mxu0 %v149
    %474 = vmatprep.subr.mxu0 0.0
    %475 = vmatpush1.msra.mxu0 %v150
    %476 = vmatprep.mubr.f32.mxu0 %v193
    %477 = vmatmul.mubr.f32.gmra.mrb[0].mxu0 %v191
    %v478 = vpop.f32.mrb[0].mxu0
    %v479 = vadd.f32 %v409, %v478
    %v480 = vpop.f32.mrb[0].mxu0
    %481 = vdwg.mxu0
    %v482 = vmax.f32 %v479, 0.0
    %v483 = vld [vmem:[%s3] sm:$0xff]
    %v484 = vld [vmem:[%s3 + $0x8] sm:$0xff]
    %v485 = vld [vmem:[%s4] sm:$0x1]
    %v487 = vlaneseq
    %v488 = vshrl.u32 %v487, 7
    %v489 = vsub.s32 0, %v488
    %v490 = vrot.slane %v485, %v489
    %vm492 = vcmask 130048
    %v494 = vsel %vm492, %v482, 0
    %496 = vmatprep.subr.mxu0 0.0
    %497 = vmatpush1.msra.mxu0 %v483
    %498 = vmatprep.subr.mxu0 0.0
    %499 = vmatpush1.msra.mxu0 %v484
    %500 = vmatprep.subr.mxu0 0.0
    %501 = vmatpush1.msra.mxu0 0.0
    %502 = vmatprep.subr.mxu0 0.0
    %503 = vmatpush1.msra.mxu0 0.0
    %504 = vmatprep.subr.mxu0 0.0
    %505 = vmatpush1.msra.mxu0 0.0
    %506 = vmatprep.subr.mxu0 0.0
    %507 = vmatpush1.msra.mxu0 0.0
    %508 = vmatprep.subr.mxu0 0.0
    %509 = vmatpush1.msra.mxu0 0.0
    %510 = vmatprep.subr.mxu0 0.0
    %511 = vmatpush1.msra.mxu0 0.0
    %512 = vmatprep.subr.mxu0 0.0
    %513 = vmatpush1.msra.mxu0 0.0
    %514 = vmatprep.subr.mxu0 0.0
    %515 = vmatpush1.msra.mxu0 0.0
    %516 = vmatprep.subr.mxu0 0.0
    %517 = vmatpush1.msra.mxu0 0.0
    %518 = vmatprep.subr.mxu0 0.0
    %519 = vmatpush1.msra.mxu0 0.0
    %520 = vmatprep.subr.mxu0 0.0
    %521 = vmatpush1.msra.mxu0 0.0
    %522 = vmatprep.subr.mxu0 0.0
    %523 = vmatpush1.msra.mxu0 0.0
    %524 = vmatprep.subr.mxu0 0.0
    %525 = vmatpush1.msra.mxu0 0.0
    %526 = vmatprep.subr.mxu0 0.0
    %527 = vmatpush1.msra.mxu0 0.0
    %528 = vmatprep.subr.mxu0 0.0
    %529 = vmatpush1.msra.mxu0 0.0
    %530 = vmatprep.subr.mxu0 0.0
    %531 = vmatpush1.msra.mxu0 0.0
    %532 = vmatprep.subr.mxu0 0.0
    %533 = vmatpush1.msra.mxu0 0.0
    %534 = vmatprep.subr.mxu0 0.0
    %535 = vmatpush1.msra.mxu0 0.0
    %536 = vmatprep.subr.mxu0 0.0
    %537 = vmatpush1.msra.mxu0 0.0
    %538 = vmatprep.subr.mxu0 0.0
    %539 = vmatpush1.msra.mxu0 0.0
    %540 = vmatprep.subr.mxu0 0.0
    %541 = vmatpush1.msra.mxu0 0.0
    %542 = vmatprep.subr.mxu0 0.0
    %543 = vmatpush1.msra.mxu0 0.0
    %544 = vmatprep.subr.mxu0 0.0
    %545 = vmatpush1.msra.mxu0 0.0
    %546 = vmatprep.subr.mxu0 0.0
    %547 = vmatpush1.msra.mxu0 0.0
    %548 = vmatprep.subr.mxu0 0.0
    %549 = vmatpush1.msra.mxu0 0.0
    %550 = vmatprep.subr.mxu0 0.0
    %551 = vmatpush1.msra.mxu0 0.0
    %552 = vmatprep.subr.mxu0 0.0
    %553 = vmatpush1.msra.mxu0 0.0
    %554 = vmatprep.subr.mxu0 0.0
    %555 = vmatpush1.msra.mxu0 0.0
    %556 = vmatprep.subr.mxu0 0.0
    %557 = vmatpush1.msra.mxu0 0.0
    %558 = vmatprep.subr.mxu0 0.0
    %559 = vmatpush1.msra.mxu0 0.0
    %560 = vmatprep.mubr.f32.mxu0 0.0
    %561 = vmatmul.mubr.f32.gmra.mrb[0].mxu0 %v494
    %v562 = vpop.f32.mrb[0].mxu0
    %v563 = vadd.f32 %v490, %v562
    %v564 = vpop.f32.mrb[0].mxu0
    %565 = vdwg.mxu0
    %vm566 = vcmask 9216
    %v567 = vsel %vm566, %v563, -inf
    %568 = vmax.xlane.f32.xlu0 %v567
    %v569 = vpop.xlane.xlu0 %568
    %v570 = vsub.f32 %v563, %v569
    %v571 = vmul.f32 %v570, 1.442695
    %v572 = vpow.pop %v571
    %v573 = vsel %vm566, %v572, 0.0
    %574 = vadd.xlane.f32.xlu0 %v573
    %v575 = vpop.xlane.xlu0 %574
    %v576 = vrcp.pop %v575
    %v577 = vmul.f32 %v572, %v576
    %578 = vst.msk [vmem:[#allocation2] sm:$0x3] %vm566, %v577
    // Predicated region
    $region22: #{order_classifier_forward.1} parent=1 // pred_check
      _
    $region23: #{order_classifier_forward.1} parent=1 // pred_check_branch
      %580 = sbr.rel (0) target = $region25
    $region24: #{order_classifier_forward.1} parent=1 // pred_region
      %s582 = ssub.s32 32, 32
      %583 = vsyncadd [#allocation3], %s582
      %s585 = sshll.u32 [#allocation2], 4
      %s586 = int_to_ptr.vmem [resolvable:$true] %s585
      %588 = dma.vmem_to_hbm [thread:$0]  %s586, 32, %s5, [#allocation3]
    $region25: #{order_classifier_forward.1} parent=1 // pred_fallthru
      _
    // Predicated region
    $region26: #{order_classifier_forward.1} parent=1 // pred_check
      _
    $region27: #{order_classifier_forward.1} parent=1 // pred_check_branch
      %590 = sbr.rel (0) target = $region29
    $region28: #{order_classifier_forward.1} parent=1 // pred_region
      %591 = dma.done [#allocation3], 32
    $region29: #{order_classifier_forward.1} parent=1 // pred_fallthru
      _
    %592 = vsyncpa [#allocation3], 1

</llo_original>
